<compile_context>
chip_gen: v7x
topology: tpu7x:2x2x1
jax: 0.10.0
libtpu: 0.0.40
codegen_flags: <defaults>
</compile_context>

<pallas_src>
import functools

import jax
import jax.numpy as jnp
from jax.experimental import pallas as pl
from jax.experimental.pallas import tpu as pltpu


def _round_up(v, m):
    return ((v + m - 1) // m) * m


def _pick_batch(n, per_sample_bytes, cap=16, budget=20 * 1024 * 1024):
    """Samples per grid step: biggest tile that fits comfortably in scoped VMEM
    (v7x has only 64 MiB physical / 32 MiB default scoped), capped so that with
    n >= 2 there are at least two grid steps for v7x's 2 TensorCores."""
    b = max(1, min(cap, budget // max(per_sample_bytes, 1), n))
    if n >= 2:
        b = min(b, (n + 1) // 2)
    return int(b)


# ----------------------------------------------------------------------------
# Kernel 1: batched covariance + shrinkage
# ----------------------------------------------------------------------------
def _cov_shrink_kernel(coef_ref, x_ref, out_ref, *, shrinkage_strategy,
                       n_assets, mxu_dtype):
    # coef_ref: (B, 1, 1) float32 in VMEM
    # x_ref:    (B, n_channels, a_pad) in VMEM
    # out_ref:  (B, a_pad, a_pad) float32 in VMEM
    x = x_ref[...].astype(jnp.float32)                   # (B, C, A)
    n_chan = x.shape[1]
    # TODO(synk): matches torch.cov -- divides by zero when n_channels == 1.
    fact = 1.0 / (n_chan - 1)
    mc = x - jnp.mean(x, axis=1, keepdims=True)          # demean over channels (f32)
    mc_in = mc.astype(mxu_dtype) if mxu_dtype is not None else mc

    # s[b] = fact * mc[b]^T @ mc[b]  -- contract the channel axis on the MXU.
    s = jax.lax.dot_general(
        mc_in, mc_in, (((1,), (1,)), ((0,), (0,))),
        preferred_element_type=jnp.float32) * fact        # (B, A, A)

    if shrinkage_strategy is None:
        out_ref[...] = s.astype(out_ref.dtype)
        return

    a_pad = s.shape[-1]
    eye = (jax.lax.broadcasted_iota(jnp.int32, (a_pad, a_pad), 0)
           == jax.lax.broadcasted_iota(jnp.int32, (a_pad, a_pad), 1))[None, :, :]
    c = coef_ref[...]                                     # (B, 1, 1) float32
    cs = c * s

    if shrinkage_strategy == 'diagonal':
        # c*s + (1-c)*diag(s)  ==  select(eye, s, c*s)
        out = jnp.where(eye, s, cs)
    elif shrinkage_strategy == 'identity':
        out = jnp.where(eye, cs + (1.0 - c), cs)
    elif shrinkage_strategy == 'scaled_identity':
        # mean of the *true* (unpadded) diagonal; padded diagonal entries are 0.
        diag_mean = jnp.sum(jnp.where(eye, s, 0.0), axis=(1, 2),
                            keepdims=True) / n_assets
        out = jnp.where(eye, cs + (1.0 - c) * diag_mean, cs)
    else:
        raise ValueError(f'Unrecognized shrinkage strategy {shrinkage_strategy}')

    out_ref[...] = out.astype(out_ref.dtype)


def covariance_shrinkage(x, shrinkage_coef, shrinkage_strategy='diagonal'):
    """x: (n, C, A) -> shrunk covariance (n, A, A) in float32."""
    n, ch, a = x.shape
    a_pad = _round_up(a, 128)
    # double-buffered in/out blocks + ~3 live f32 intermediates per sample
    per_sample = 4 * (2 * ch * a_pad + 5 * a_pad * a_pad)
    b = _pick_batch(n, per_sample)
    n_pad = _round_up(n, b)

    xp = jnp.pad(x, ((0, n_pad - n), (0, 0), (0, a_pad - a)))
    coef = jnp.pad(shrinkage_coef.astype(jnp.float32),
                   ((0, n_pad - n),)).reshape(n_pad, 1, 1)

    mxu_dtype = jnp.bfloat16 if x.dtype == jnp.bfloat16 else None
    kernel = functools.partial(_cov_shrink_kernel,
                               shrinkage_strategy=shrinkage_strategy,
                               n_assets=a, mxu_dtype=mxu_dtype)
    cov = pl.pallas_call(
        kernel,
        out_shape=jax.ShapeDtypeStruct((n_pad, a_pad, a_pad), jnp.float32),
        grid=(n_pad // b,),
        in_specs=[
            pl.BlockSpec((b, 1, 1), lambda i: (i, 0, 0)),       # f32 shrinkage coefs
            pl.BlockSpec((b, ch, a_pad), lambda i: (i, 0, 0)),  # B samples per step
        ],
        out_specs=pl.BlockSpec((b, a_pad, a_pad), lambda i: (i, 0, 0)),
        compiler_params=pltpu.CompilerParams(dimension_semantics=("parallel",)),
    )(coef, xp)
    return cov[:n, :a, :a]


# ----------------------------------------------------------------------------
# Kernel 2: batched square-root reconstruction  v @ diag(sqrt(w)) @ v^T
# (no transposes: columns of v are scaled, then an NT-form dot_general)
# ----------------------------------------------------------------------------
def _sqrt_recon_kernel(v_ref, ssqrt_ref, out_ref):
    # v_ref:     (B, A, A) float32, columns = eigenvectors
    # ssqrt_ref: (B, 1, A) float32, sqrt of (masked, clamped) eigenvalues
    # out_ref:   (B, A, A)
    v = v_ref[...]
    scaled = v * ssqrt_ref[...]                           # scale columns
    out = jax.lax.dot_general(
        scaled, v, (((2,), (2,)), ((0,), (0,))),          # scaled @ v^T per sample
        preferred_element_type=jnp.float32)
    out_ref[...] = out.astype(out_ref.dtype)


def sqrt_reconstruct(v, ssqrt, out_dtype):
    n, a, _ = v.shape
    a_pad = _round_up(a, 128)
    per_sample = 4 * 6 * a_pad * a_pad
    b = _pick_batch(n, per_sample)
    n_pad = _round_up(n, b)

    vp = jnp.pad(v.astype(jnp.float32),
                 ((0, n_pad - n), (0, a_pad - a), (0, a_pad - a)))
    sp = jnp.pad(ssqrt.astype(jnp.float32).reshape(n, 1, a),
                 ((0, n_pad - n), (0, 0), (0, a_pad - a)))

    out = pl.pallas_call(
        _sqrt_recon_kernel,
        out_shape=jax.ShapeDtypeStruct((n_pad, a_pad, a_pad), out_dtype),
        grid=(n_pad // b,),
        in_specs=[
            pl.BlockSpec((b, a_pad, a_pad), lambda i: (i, 0, 0)),
            pl.BlockSpec((b, 1, a_pad), lambda i: (i, 0, 0)),
        ],
        out_specs=pl.BlockSpec((b, a_pad, a_pad), lambda i: (i, 0, 0)),
        compiler_params=pltpu.CompilerParams(dimension_semantics=("parallel",)),
    )(vp, sp)
    return out[:n, :a, :a]


# ----------------------------------------------------------------------------
# Module-equivalent wrapper
# ----------------------------------------------------------------------------
def covariance_matrix(x, shrinkage_coef=None, *, sqrt=True,
                      shrinkage_strategy='diagonal', static_shrinkage_coef=0.5):
    """x: (n_samples, n_channels, n_assets) -> (n_samples, n_assets, n_assets)."""
    n = x.shape[0]
    if (shrinkage_coef is None) == (static_shrinkage_coef is None):
        raise ValueError('Not clear which shrinkage coefficient to use')
    if shrinkage_coef is None:
        shrinkage_coef = static_shrinkage_coef * jnp.ones((n,), jnp.float32)

    cov = covariance_shrinkage(x, shrinkage_coef, shrinkage_strategy)  # float32
    if not sqrt:
        return cov.astype(x.dtype)

    # TODO(synk): the eigendecomposition itself has no Pallas equivalent; it is a
    # batched jnp.linalg.eigh (cheaper than SVD and identical on the PSD shrunk
    # covariance).  Zeroing the small/negative eigenvalues is numerically
    # identical to the reference's singular-value truncation.
    w, v = jnp.linalg.eigh(cov)
    w = jnp.maximum(w, 0.0)
    good = w > (jnp.max(w, axis=-1, keepdims=True)
                * w.shape[-1] * jnp.finfo(w.dtype).eps)
    ssqrt = jnp.sqrt(jnp.where(good, w, 0.0))
    return sqrt_reconstruct(v, ssqrt, x.dtype)


# ----------------------------------------------------------------------------
# Pure-JAX reference (mirrors the PyTorch code) for a sanity check
# ----------------------------------------------------------------------------
def _reference(x, coef):
    outs = []
    for i in range(x.shape[0]):
        m = x[i].T                                        # (A, C)
        m = m - jnp.mean(m, axis=1, keepdims=True)
        s = (m @ m.T) / (m.shape[1] - 1)
        s = coef[i] * s + (1.0 - coef[i]) * jnp.diag(jnp.diag(s))
        _, sv, vh = jnp.linalg.svd(s)
        v = vh.T
        good = sv > sv.max() * sv.shape[-1] * jnp.finfo(sv.dtype).eps
        sv = jnp.where(good, sv, 0.0)
        outs.append((v * jnp.sqrt(sv)[None, :]) @ v.T)
    return jnp.stack(outs, axis=0)


if __name__ == "__main__":
    key = jax.random.PRNGKey(0)
    n_samples, n_channels, n_assets = 2, 8, 16
    x = jax.random.normal(key, (n_samples, n_channels, n_assets), dtype=jnp.float32)

    out = covariance_matrix(x, sqrt=True, shrinkage_strategy='diagonal',
                            static_shrinkage_coef=0.5)
    out = jax.block_until_ready(out)
    assert out.shape == (n_samples, n_assets, n_assets)

    ref = jax.block_until_ready(
        _reference(x, 0.5 * jnp.ones((n_samples,), jnp.float32)))
    max_err = float(jnp.max(jnp.abs(out - ref)))
    assert max_err < 1e-2, f"max abs error {max_err}"

    # also exercise the non-sqrt path once
    cov_only = jax.block_until_ready(
        covariance_matrix(x, sqrt=False, shrinkage_strategy='diagonal',
                          static_shrinkage_coef=0.5))
    assert cov_only.shape == (n_samples, n_assets, n_assets)

    print("KERNEL_OK")
</pallas_src>

<mosaic_0001>
module attributes {stable_mosaic.version = 11 : i64} {
  func.func @_cov_shrink_kernel(%arg0: i32, %arg1: memref<1x1x1xf32, #tpu.memory_space<vmem>>, %arg2: memref<1x8x128xf32, #tpu.memory_space<vmem>>, %arg3: memref<1x128x128xf32, #tpu.memory_space<vmem>>) attributes {dimension_semantics = [#tpu.dimension_semantics<parallel>], iteration_bounds = array<i64: 2>, scalar_prefetch = 0 : i64, scratch_operands = 0 : i64, tpu.core_type = #tpu.core_type<tc>, window_params = [{transform_indices = @transform_0, window_bounds = array<i64: 1, 1, 1>}, {transform_indices = @transform_1, window_bounds = array<i64: 1, 8, 128>}, {transform_indices = @transform_2, window_bounds = array<i64: 1, 128, 128>}]} {
    %c0 = arith.constant 0 : index
    %c0_0 = arith.constant 0 : index
    %c0_1 = arith.constant 0 : index
    %0 = vector.load %arg2[%c0, %c0_0, %c0_1] : memref<1x8x128xf32, #tpu.memory_space<vmem>>, vector<1x8x128xf32>
    %cst = arith.constant dense<0.000000e+00> : vector<1x128xf32>
    %1 = vector.multi_reduction <add>, %0, %cst [1] : vector<1x8x128xf32> to vector<1x128xf32>
    %2 = vector.shape_cast %1 : vector<1x128xf32> to vector<1x1x128xf32>
    %cst_2 = arith.constant 8.000000e+00 : f32
    %3 = vector.broadcast %cst_2 : f32 to vector<1x1x128xf32>
    %4 = arith.divf %2, %3 : vector<1x1x128xf32>
    %5 = vector.broadcast %4 : vector<1x1x128xf32> to vector<1x8x128xf32>
    %6 = arith.subf %0, %5 : vector<1x8x128xf32>
    %cst_3 = arith.constant dense<0.000000e+00> : vector<1x128x128xf32>
    %7 = tpu.matmul %6, %6, %cst_3 {dimension_numbers = #tpu.dot_dimension_numbers<[1], [1], [2], [2], [0, 0, 0, 2, 1, 2], [0], [0]>} : vector<1x8x128xf32>, vector<1x8x128xf32>, vector<1x128x128xf32> -> vector<1x128x128xf32>
    %cst_4 = arith.constant 0.142857149 : f32
    %8 = vector.broadcast %cst_4 : f32 to vector<1x128x128xf32>
    %9 = arith.mulf %7, %8 : vector<1x128x128xf32>
    %10 = tpu.iota {dimensions = array<i32: 0>} : vector<128x128xi32>
    %11 = tpu.iota {dimensions = array<i32: 1>} : vector<128x128xi32>
    %12 = arith.cmpi eq, %10, %11 : vector<128x128xi32>
    %13 = vector.shape_cast %12 : vector<128x128xi1> to vector<1x128x128xi1>
    %c0_5 = arith.constant 0 : index
    %c0_6 = arith.constant 0 : index
    %c0_7 = arith.constant 0 : index
    %14 = vector.load %arg1[%c0_5, %c0_6, %c0_7] : memref<1x1x1xf32, #tpu.memory_space<vmem>>, vector<1x1x1xf32>
    %15 = vector.broadcast %14 : vector<1x1x1xf32> to vector<1x128x128xf32>
    %16 = arith.mulf %15, %9 : vector<1x128x128xf32>
    %17 = arith.select %13, %9, %16 : vector<1x128x128xi1>, vector<1x128x128xf32>
    %c0_8 = arith.constant 0 : index
    %c0_9 = arith.constant 0 : index
    %c0_10 = arith.constant 0 : index
    %18 = vector.load %arg3[%c0_8, %c0_9, %c0_10] : memref<1x128x128xf32, #tpu.memory_space<vmem>>, vector<1x128x128xf32>
    tpu.vector_store %arg3[%c0_8, %c0_9, %c0_10], %17 {strides = array<i32>} : memref<1x128x128xf32, #tpu.memory_space<vmem>>, vector<1x128x128xf32>,
    return
  }
  func.func @transform_0(%arg0: i32) -> (i32, i32, i32) {
    %c0_i32 = arith.constant 0 : i32
    %c0_i32_0 = arith.constant 0 : i32
    %c0_i32_1 = arith.constant 0 : i32
    return %arg0, %c0_i32, %c0_i32_0 : i32, i32, i32
  }
  func.func @transform_1(%arg0: i32) -> (i32, i32, i32) {
    %c0_i32 = arith.constant 0 : i32
    %c0_i32_0 = arith.constant 0 : i32
    %c0_i32_1 = arith.constant 0 : i32
    return %arg0, %c0_i32, %c0_i32_0 : i32, i32, i32
  }
  func.func @transform_2(%arg0: i32) -> (i32, i32, i32) {
    %c0_i32 = arith.constant 0 : i32
    %c0_i32_0 = arith.constant 0 : i32
    %c0_i32_1 = arith.constant 0 : i32
    return %arg0, %c0_i32, %c0_i32_0 : i32, i32, i32
  }
}

</mosaic_0001>

<llo_original>
// kernel: tpu_custom_call.1
$region0: #{tpu_custom_call.1}
  #allocation0 [shape = 'u32[]', space=smem, size = 0x4, offset = 0x4, fixed_abs, tag = 'smem constant byte address 0x4 - core index']
  #allocation1 [shape = 'u32[144,128]{1,0:T(1,128)}', space=vmem, size = 0x12000, scoped, tag = 'internal scratch']
  %s0 = inlined_call_operand.vmem [shape: f32[2,1,1], index: 0, kind: input, shape index: {}]
  %s1 = inlined_call_operand.hbm [shape: f32[2,8,128], index: 1, kind: input, shape index: {}]
  %s2 = inlined_call_operand.hbm [shape: f32[2,128,128], index: 2, kind: output, shape index: {}]
  %s3 = sld [smem:[#allocation0]]
  $region45: #{tpu_custom_call.1} parent=0
    _
  %s5 = ssub.s32 1, %s3
  %s6 = scalar_select 0, %s5, %s3
  $region1: #{tpu_custom_call.1} parent=0
    #allocation2 [shape = 'u8[8192]{0}', space=vmem, size = 0x2000, scoped, tag = 'input window, operand 1']
    #allocation3 [shape = 's32[2]{0}', space=sflag, size = 0x8, scoped, tag = 'scoped memory for tpu_custom_call.1']
    #allocation4 [shape = 's32[2]{0}', space=sflag, size = 0x8, scoped, tag = 'scoped memory for tpu_custom_call.1']
    #allocation5 [shape = 'u8[131072]{0}', space=vmem, size = 0x20000, scoped, tag = 'output window, operand 0']
    %7 = vsyncpa [#allocation3], 0
    %s8 = scalar_lea.sflag [#allocation3], 1
    %9 = vsyncpa %s8, 0
    %10 = vsyncpa [#allocation4], 0
    %s11 = scalar_lea.sflag [#allocation4], 1
    %12 = vsyncpa %s11, 0
    loop: start=0, step=1, limit=4
    $region2: #{tpu_custom_call.1} parent=1 // loop_pre_header
      _
    $region3: #{tpu_custom_call.1} parent=1 // loop_header
      %s14 = sphi 0, %s18
      %p15 = scmp.ge.s32.totalorder %s14, 4
      %s24 = sphi 0, %s26
      %s27 = sphi 0, %s24
      %s28 = sphi 0, %s27
      %s44 = sphi 0, %s28
      %s50 = sphi 0, %s52
      %s53 = sphi 0, %s50
      %s54 = sphi 0, %s53
      %s70 = sphi 0, %s54
      %s76 = sphi 0, %s78
      %s79 = sphi 0, %s76
      %s80 = sphi 0, %s79
      %s96 = sphi 0, %s80
    $region4: #{tpu_custom_call.1} parent=1 // loop_header_branch
      %17 = sbr.rel (%p15) target = $region8
    $region5: #{tpu_custom_call.1} parent=1 // loop_body
      %s19 = ssub.s32 %s14, 1
      %s20 = ssub.s32 %s14, 2
      %s21 = sadd.s32 %s14, 1
      %s22 = ssub.s32 %s14, %s21
      %p23 = scmp.eq.s32.totalorder %s22, 0
      %s25 = sadd.s32 %s24, 1
      %s26 = scalar_select %p23, %s24, %s25
      %p29 = pneg %p23
      %p30 = scmp.eq.s32.totalorder %s14, 1
      %p31 = por %p29, %p30
      %p32 = scmp.ne.s32.totalorder %s24, %s27
      %p33 = scmp.eq.s32.totalorder %s14, 0
      %p34 = por %p32, %p33
      %p35 = scmp.ne.s32.totalorder %s24, %s27
      %p36 = scmp.eq.s32.totalorder %s19, 1
      %p37 = por %p35, %p36
      %p38 = scmp.ne.s32.totalorder %s27, %s28
      %p39 = scmp.eq.s32.totalorder %s19, 0
      %p40 = por %p38, %p39
      %p41 = scmp.ne.s32.totalorder %s27, %s28
      %p42 = scmp.eq.s32.totalorder %s20, 1
      %p43 = por %p41, %p42
      %p45 = scmp.ne.s32.totalorder %s28, %s44
      %p46 = scmp.eq.s32.totalorder %s20, 0
      %p47 = por %p45, %p46
      %s48 = ssub.s32 %s14, %s21
      %p49 = scmp.eq.s32.totalorder %s48, 0
      %s51 = sadd.s32 %s50, 1
      %s52 = scalar_select %p49, %s50, %s51
      %p55 = pneg %p49
      %p56 = scmp.eq.s32.totalorder %s14, 1
      %p57 = por %p55, %p56
      %p58 = scmp.ne.s32.totalorder %s50, %s53
      %p59 = scmp.eq.s32.totalorder %s14, 0
      %p60 = por %p58, %p59
      %p61 = scmp.ne.s32.totalorder %s50, %s53
      %p62 = scmp.eq.s32.totalorder %s19, 1
      %p63 = por %p61, %p62
      %p64 = scmp.ne.s32.totalorder %s53, %s54
      %p65 = scmp.eq.s32.totalorder %s19, 0
      %p66 = por %p64, %p65
      %p67 = scmp.ne.s32.totalorder %s53, %s54
      %p68 = scmp.eq.s32.totalorder %s20, 1
      %p69 = por %p67, %p68
      %p71 = scmp.ne.s32.totalorder %s54, %s70
      %p72 = scmp.eq.s32.totalorder %s20, 0
      %p73 = por %p71, %p72
      %s74 = ssub.s32 %s14, %s21
      %p75 = scmp.eq.s32.totalorder %s74, 0
      %s77 = sadd.s32 %s76, 1
      %s78 = scalar_select %p75, %s76, %s77
      %p81 = pneg %p75
      %p82 = scmp.eq.s32.totalorder %s14, 1
      %p83 = por %p81, %p82
      %p84 = scmp.ne.s32.totalorder %s76, %s79
      %p85 = scmp.eq.s32.totalorder %s14, 0
      %p86 = por %p84, %p85
      %p87 = scmp.ne.s32.totalorder %s76, %s79
      %p88 = scmp.eq.s32.totalorder %s19, 1
      %p89 = por %p87, %p88
      %p90 = scmp.ne.s32.totalorder %s79, %s80
      %p91 = scmp.eq.s32.totalorder %s19, 0
      %p92 = por %p90, %p91
      %p93 = scmp.ne.s32.totalorder %s79, %s80
      %p94 = scmp.eq.s32.totalorder %s20, 1
      %p95 = por %p93, %p94
      %p97 = scmp.ne.s32.totalorder %s80, %s96
      %p98 = scmp.eq.s32.totalorder %s20, 0
      %p99 = por %p97, %p98
      %p100 = scmp.le.s32.totalorder 1, %s14
      %p101 = scmp.lt.s32.totalorder %s14, 3
      %p102 = pnand %p100, %p101
      %p103 = pneg %p102
      // Predicated region
      $region9: #{tpu_custom_call.1} parent=5 // pred_check
        _
      $region10: #{tpu_custom_call.1} parent=5 // pred_check_branch
        %105 = sbr.rel (%p102) target = $region12
      $region11: #{tpu_custom_call.1} parent=5 // pred_region
        %s106 = ssub.s32 %s14, 1
      $region12: #{tpu_custom_call.1} parent=5 // pred_fallthru
        _
      %p107 = scmp.lt.s32.totalorder %s14, 2
      // Predicated region
      $region13: #{tpu_custom_call.1} parent=5 // pred_check
        %p108 = pneg %p107
      $region14: #{tpu_custom_call.1} parent=5 // pred_check_branch
        %110 = sbr.rel (%p108) target = $region16
      $region15: #{tpu_custom_call.1} parent=5 // pred_region
        // Predicated region
        $region17: #{tpu_custom_call.1} parent=15 // pred_check
          %p111 = pneg %p34
        $region18: #{tpu_custom_call.1} parent=15 // pred_check_branch
          %113 = sbr.rel (%p111) target = $region20
        $region19: #{tpu_custom_call.1} parent=15 // pred_region
          %p114 = scmp.lt.s32.totalorder %s14, 1
          %s115 = scalar_select %p114, %s14, 1
          %s116 = scalar_lea.vmem %s0, %s115
        $region20: #{tpu_custom_call.1} parent=15 // pred_fallthru
          _
        // Predicated region
        $region21: #{tpu_custom_call.1} parent=15 // pred_check
          %p117 = pneg %p60
        $region22: #{tpu_custom_call.1} parent=15 // pred_check_branch
          %119 = sbr.rel (%p117) target = $region24
        $region23: #{tpu_custom_call.1} parent=15 // pred_region
          %s120 = sand.u32 %s50, 1
          %s121 = scalar_lea.sflag [#allocation3], %s120
          %s122 = sand.u32 %s50, 1
          %s123 = smul.addr %s122, 8
          %s124 = scalar_lea.vmem [#allocation2], %s123
          %s126 = ssub.s32 128, 128
          %127 = vsyncadd %s121, %s126
          %s128 = smul.addr %s14, 128
          %s129 = scalar_lea.hbm %s1, %s128
          %s131 = sshll.u32 %s124, 4
          %s132 = int_to_ptr.vmem [resolvable:$true] %s131
          %134 = dma.hbm_to_vmem [thread:$0]  %s129, 128, %s132, %s121
        $region24: #{tpu_custom_call.1} parent=15 // pred_fallthru
          _
      $region16: #{tpu_custom_call.1} parent=5 // pred_fallthru
        _
      %p135 = scmp.le.s32.totalorder 1, %s14
      %p136 = scmp.lt.s32.totalorder %s14, 3
      %p137 = pnand %p135, %p136
      %p138 = pneg %p137
      // Predicated region
      $region25: #{tpu_custom_call.1} parent=5 // pred_check
        _
      $region26: #{tpu_custom_call.1} parent=5 // pred_check_branch
        %140 = sbr.rel (%p137) target = $region28
      $region27: #{tpu_custom_call.1} parent=5 // pred_region
        %s141 = ssub.s32 %s14, 1
        %s142 = sand.u32 %s53, 1
        %s143 = scalar_lea.sflag [#allocation3], %s142
        %s144 = sand.u32 %s53, 1
        %s145 = smul.addr %s144, 8
        %s146 = scalar_lea.vmem [#allocation2], %s145
        // Predicated region
        $region29: #{tpu_custom_call.1} parent=27 // pred_check
          %p147 = pneg %p66
        $region30: #{tpu_custom_call.1} parent=27 // pred_check_branch
          %149 = sbr.rel (%p147) target = $region32
        $region31: #{tpu_custom_call.1} parent=27 // pred_region
          %150 = dma.done %s143, 128
        $region32: #{tpu_custom_call.1} parent=27 // pred_fallthru
          _
        %p151 = scmp.lt.s32.totalorder %s19, 1
        %s152 = scalar_select %p151, %s19, 1
        %s153 = scalar_lea.vmem %s0, %s152
        %p154 = pneg %p40
        %p155 = pneg %p37
        %s156 = sand.u32 %s53, 1
        %s157 = scalar_lea.sflag [#allocation3], %s156
        %s158 = sand.u32 %s53, 1
        %s159 = smul.addr %s158, 8
        %s160 = scalar_lea.vmem [#allocation2], %s159
        %p161 = pneg %p66
        %p162 = pneg %p63
        %p163 = pneg %p92
        %p164 = pneg %p89
        %s165 = sand.u32 %s79, 1
        %s166 = scalar_lea.sflag [#allocation4], %s165
        %s167 = sand.u32 %s79, 1
        %s168 = smul.addr %s167, 128
        %s169 = scalar_lea.vmem [#allocation5], %s168
        %p170 = scmp.lt.s32.totalorder %s19, 1
        %s171 = scalar_select %p170, %s19, 1
        %s172 = scalar_lea.vmem %s0, %s171
        %v173 = vld [vmem:[%s146] sm:$0xff]
        %v174 = vrot.slane %v173, 4
        %v175 = vadd.f32 %v173, %v174
        %v176 = vrot.slane %v175, 2
        %v177 = vadd.f32 %v175, %v176
        %v178 = vrot.slane %v177, 1
        %v179 = vadd.f32 %v177, %v178
        %v180 = vrcp.pop 8.0
        %v181 = vmul.f32 %v179, %v180
        %v182 = vsub.f32 %v173, %v181
        %183 = vxpose.xlu0.b32.start [1/16] %v182, 128
        %184 = vxpose.xlu0.b32.cont [2/16] 0.0, 128
        %185 = vxpose.xlu0.b32.cont [3/16] 0.0, 128
        %186 = vxpose.xlu0.b32.cont [4/16] 0.0, 128
        %187 = vxpose.xlu0.b32.cont [5/16] 0.0, 128
        %188 = vxpose.xlu0.b32.cont [6/16] 0.0, 128
        %189 = vxpose.xlu0.b32.cont [7/16] 0.0, 128
        %190 = vxpose.xlu0.b32.cont [8/16] 0.0, 128
        %191 = vxpose.xlu0.b32.cont [9/16] 0.0, 128
        %192 = vxpose.xlu0.b32.cont [10/16] 0.0, 128
        %193 = vxpose.xlu0.b32.cont [11/16] 0.0, 128
        %194 = vxpose.xlu0.b32.cont [12/16] 0.0, 128
        %195 = vxpose.xlu0.b32.cont [13/16] 0.0, 128
        %196 = vxpose.xlu0.b32.cont [14/16] 0.0, 128
        %197 = vxpose.xlu0.b32.cont [15/16] 0.0, 128
        %198 = vxpose.xlu0.b32.end [16/16] 0.0, 128
        %v199 = vpop.trf.xlu0
        %v200 = vpop.trf.xlu0
        %v201 = vpop.trf.xlu0
        %v202 = vpop.trf.xlu0
        %v203 = vpop.trf.xlu0
        %v204 = vpop.trf.xlu0
        %v205 = vpop.trf.xlu0
        %v206 = vpop.trf.xlu0
        %v207 = vpop.trf.xlu0
        %v208 = vpop.trf.xlu0
        %v209 = vpop.trf.xlu0
        %v210 = vpop.trf.xlu0
        %v211 = vpop.trf.xlu0
        %v212 = vpop.trf.xlu0
        %v213 = vpop.trf.xlu0
        %v214 = vpop.trf.xlu0
        %vm215 = vcmask 64512
        %v217 = vsel %vm215, %v199, 0
        %v220 = vsel %vm215, %v200, 0
        %v223 = vsel %vm215, %v201, 0
        %v226 = vsel %vm215, %v202, 0
        %v229 = vsel %vm215, %v203, 0
        %v232 = vsel %vm215, %v204, 0
        %v235 = vsel %vm215, %v205, 0
        %v238 = vsel %vm215, %v206, 0
        %v241 = vsel %vm215, %v207, 0
        %v244 = vsel %vm215, %v208, 0
        %v247 = vsel %vm215, %v209, 0
        %v250 = vsel %vm215, %v210, 0
        %v253 = vsel %vm215, %v211, 0
        %v256 = vsel %vm215, %v212, 0
        %v259 = vsel %vm215, %v213, 0
        %v262 = vsel %vm215, %v214, 0
        %264 = vmatprep.subr.mxu0 0.0
        %265 = vmatpush1.msra.mxu0 %v182
        %266 = vmatprep.subr.mxu0 0.0
        %267 = vmatpush1.msra.mxu0 0.0
        %268 = vmatprep.subr.mxu0 0.0
        %269 = vmatpush1.msra.mxu0 0.0
        %270 = vmatprep.subr.mxu0 0.0
        %271 = vmatpush1.msra.mxu0 0.0
        %272 = vmatprep.subr.mxu0 0.0
        %273 = vmatpush1.msra.mxu0 0.0
        %274 = vmatprep.subr.mxu0 0.0
        %275 = vmatpush1.msra.mxu0 0.0
        %276 = vmatprep.subr.mxu0 0.0
        %277 = vmatpush1.msra.mxu0 0.0
        %278 = vmatprep.subr.mxu0 0.0
        %279 = vmatpush1.msra.mxu0 0.0
        %280 = vmatprep.subr.mxu0 0.0
        %281 = vmatpush1.msra.mxu0 0.0
        %282 = vmatprep.subr.mxu0 0.0
        %283 = vmatpush1.msra.mxu0 0.0
        %284 = vmatprep.subr.mxu0 0.0
        %285 = vmatpush1.msra.mxu0 0.0
        %286 = vmatprep.subr.mxu0 0.0
        %287 = vmatpush1.msra.mxu0 0.0
        %288 = vmatprep.subr.mxu0 0.0
        %289 = vmatpush1.msra.mxu0 0.0
        %290 = vmatprep.subr.mxu0 0.0
        %291 = vmatpush1.msra.mxu0 0.0
        %292 = vmatprep.subr.mxu0 0.0
        %293 = vmatpush1.msra.mxu0 0.0
        %294 = vmatprep.subr.mxu0 0.0
        %295 = vmatpush1.msra.mxu0 0.0
        %296 = vmatprep.subr.mxu0 0.0
        %297 = vmatpush1.msra.mxu0 0.0
        %298 = vmatprep.subr.mxu0 0.0
        %299 = vmatpush1.msra.mxu0 0.0
        %300 = vmatprep.subr.mxu0 0.0
        %301 = vmatpush1.msra.mxu0 0.0
        %302 = vmatprep.subr.mxu0 0.0
        %303 = vmatpush1.msra.mxu0 0.0
        %304 = vmatprep.subr.mxu0 0.0
        %305 = vmatpush1.msra.mxu0 0.0
        %306 = vmatprep.subr.mxu0 0.0
        %307 = vmatpush1.msra.mxu0 0.0
        %308 = vmatprep.subr.mxu0 0.0
        %309 = vmatpush1.msra.mxu0 0.0
        %310 = vmatprep.subr.mxu0 0.0
        %311 = vmatpush1.msra.mxu0 0.0
        %312 = vmatprep.subr.mxu0 0.0
        %313 = vmatpush1.msra.mxu0 0.0
        %314 = vmatprep.subr.mxu0 0.0
        %315 = vmatpush1.msra.mxu0 0.0
        %316 = vmatprep.subr.mxu0 0.0
        %317 = vmatpush1.msra.mxu0 0.0
        %318 = vmatprep.subr.mxu0 0.0
        %319 = vmatpush1.msra.mxu0 0.0
        %320 = vmatprep.subr.mxu0 0.0
        %321 = vmatpush1.msra.mxu0 0.0
        %322 = vmatprep.subr.mxu0 0.0
        %323 = vmatpush1.msra.mxu0 0.0
        %324 = vmatprep.subr.mxu0 0.0
        %325 = vmatpush1.msra.mxu0 0.0
        %326 = vmatprep.subr.mxu0 0.0
        %327 = vmatpush1.msra.mxu0 0.0
        %328 = vmatprep.mubr.f32.mxu0 0.0
        %329 = vmatmul.mubr.f32.gmra.mrb[0].mxu0 %v217
        %v330 = vpop.f32.mrb[0].mxu0
        %v331 = vadd.f32 0.0, %v330
        %v332 = vpop.f32.mrb[0].mxu0
        %333 = vmatprep.mubr.f32.mxu0 0.0
        %334 = vmatmul.mubr.f32.gmra.mrb[0].mxu0 %v220
        %v335 = vpop.f32.mrb[0].mxu0
        %v336 = vadd.f32 0.0, %v335
        %v337 = vpop.f32.mrb[0].mxu0
        %338 = vmatprep.mubr.f32.mxu0 0.0
        %339 = vmatmul.mubr.f32.gmra.mrb[0].mxu0 %v223
        %v340 = vpop.f32.mrb[0].mxu0
        %v341 = vadd.f32 0.0, %v340
        %v342 = vpop.f32.mrb[0].mxu0
        %343 = vmatprep.mubr.f32.mxu0 0.0
        %344 = vmatmul.mubr.f32.gmra.mrb[0].mxu0 %v226
        %v345 = vpop.f32.mrb[0].mxu0
        %v346 = vadd.f32 0.0, %v345
        %v347 = vpop.f32.mrb[0].mxu0
        %348 = vmatprep.mubr.f32.mxu0 0.0
        %349 = vmatmul.mubr.f32.gmra.mrb[0].mxu0 %v229
        %v350 = vpop.f32.mrb[0].mxu0
        %v351 = vadd.f32 0.0, %v350
        %v352 = vpop.f32.mrb[0].mxu0
        %353 = vmatprep.mubr.f32.mxu0 0.0
        %354 = vmatmul.mubr.f32.gmra.mrb[0].mxu0 %v232
        %v355 = vpop.f32.mrb[0].mxu0
        %v356 = vadd.f32 0.0, %v355
        %v357 = vpop.f32.mrb[0].mxu0
        %358 = vmatprep.mubr.f32.mxu0 0.0
        %359 = vmatmul.mubr.f32.gmra.mrb[0].mxu0 %v235
        %v360 = vpop.f32.mrb[0].mxu0
        %v361 = vadd.f32 0.0, %v360
        %v362 = vpop.f32.mrb[0].mxu0
        %363 = vmatprep.mubr.f32.mxu0 0.0
        %364 = vmatmul.mubr.f32.gmra.mrb[0].mxu0 %v238
        %v365 = vpop.f32.mrb[0].mxu0
        %v366 = vadd.f32 0.0, %v365
        %v367 = vpop.f32.mrb[0].mxu0
        %368 = vmatprep.mubr.f32.mxu0 0.0
        %369 = vmatmul.mubr.f32.gmra.mrb[0].mxu0 %v241
        %v370 = vpop.f32.mrb[0].mxu0
        %v371 = vadd.f32 0.0, %v370
        %v372 = vpop.f32.mrb[0].mxu0
        %373 = vmatprep.mubr.f32.mxu0 0.0
        %374 = vmatmul.mubr.f32.gmra.mrb[0].mxu0 %v244
        %v375 = vpop.f32.mrb[0].mxu0
        %v376 = vadd.f32 0.0, %v375
        %v377 = vpop.f32.mrb[0].mxu0
        %378 = vmatprep.mubr.f32.mxu0 0.0
        %379 = vmatmul.mubr.f32.gmra.mrb[0].mxu0 %v247
        %v380 = vpop.f32.mrb[0].mxu0
        %v381 = vadd.f32 0.0, %v380
        %v382 = vpop.f32.mrb[0].mxu0
        %383 = vmatprep.mubr.f32.mxu0 0.0
        %384 = vmatmul.mubr.f32.gmra.mrb[0].mxu0 %v250
        %v385 = vpop.f32.mrb[0].mxu0
        %v386 = vadd.f32 0.0, %v385
        %v387 = vpop.f32.mrb[0].mxu0
        %388 = vmatprep.mubr.f32.mxu0 0.0
        %389 = vmatmul.mubr.f32.gmra.mrb[0].mxu0 %v253
        %v390 = vpop.f32.mrb[0].mxu0
        %v391 = vadd.f32 0.0, %v390
        %v392 = vpop.f32.mrb[0].mxu0
        %393 = vmatprep.mubr.f32.mxu0 0.0
        %394 = vmatmul.mubr.f32.gmra.mrb[0].mxu0 %v256
        %v395 = vpop.f32.mrb[0].mxu0
        %v396 = vadd.f32 0.0, %v395
        %v397 = vpop.f32.mrb[0].mxu0
        %398 = vmatprep.mubr.f32.mxu0 0.0
        %399 = vmatmul.mubr.f32.gmra.mrb[0].mxu0 %v259
        %v400 = vpop.f32.mrb[0].mxu0
        %v401 = vadd.f32 0.0, %v400
        %v402 = vpop.f32.mrb[0].mxu0
        %403 = vmatprep.mubr.f32.mxu0 0.0
        %404 = vmatmul.mubr.f32.gmra.mrb[0].mxu0 %v262
        %v405 = vpop.f32.mrb[0].mxu0
        %v406 = vadd.f32 0.0, %v405
        %v407 = vpop.f32.mrb[0].mxu0
        %408 = vdwg.mxu0
        %v409 = vmul.f32 %v331, 0.14285715
        %v410 = vmul.f32 %v336, 0.14285715
        %v411 = vmul.f32 %v341, 0.14285715
        %v412 = vmul.f32 %v346, 0.14285715
        %v413 = vmul.f32 %v351, 0.14285715
        %v414 = vmul.f32 %v356, 0.14285715
        %v415 = vmul.f32 %v361, 0.14285715
        %v416 = vmul.f32 %v366, 0.14285715
        %v417 = vmul.f32 %v371, 0.14285715
        %v418 = vmul.f32 %v376, 0.14285715
        %v419 = vmul.f32 %v381, 0.14285715
        %v420 = vmul.f32 %v386, 0.14285715
        %v421 = vmul.f32 %v391, 0.14285715
        %v422 = vmul.f32 %v396, 0.14285715
        %v423 = vmul.f32 %v401, 0.14285715
        %v424 = vmul.f32 %v406, 0.14285715
        %v425 = vlaneseq
        %v426 = vshrl.u32 %v425, 7
        %v427 = vadd.s32 %v426, 8
        %v428 = vadd.s32 %v426, 16
        %v429 = vadd.s32 %v426, 24
        %v430 = vadd.s32 %v426, 32
        %v431 = vadd.s32 %v426, 40
        %v432 = vadd.s32 %v426, 48
        %v433 = vadd.s32 %v426, 56
        %v434 = vadd.s32 %v426, 64
        %v435 = vadd.s32 %v426, 72
        %v436 = vadd.s32 %v426, 80
        %v437 = vadd.s32 %v426, 88
        %v438 = vadd.s32 %v426, 96
        %v439 = vadd.s32 %v426, 104
        %v440 = vadd.s32 %v426, 112
        %v441 = vadd.s32 %v426, 120
        %v442 = vlaneseq
        %v443 = vand.u32 %v442, 127
        %vm444 = vcmp.eq.s32.totalorder %v426, %v443
        %vm445 = vcmp.eq.s32.totalorder %v427, %v443
        %vm446 = vcmp.eq.s32.totalorder %v428, %v443
        %vm447 = vcmp.eq.s32.totalorder %v429, %v443
        %vm448 = vcmp.eq.s32.totalorder %v430, %v443
        %vm449 = vcmp.eq.s32.totalorder %v431, %v443
        %vm450 = vcmp.eq.s32.totalorder %v432, %v443
        %vm451 = vcmp.eq.s32.totalorder %v433, %v443
        %vm452 = vcmp.eq.s32.totalorder %v434, %v443
        %vm453 = vcmp.eq.s32.totalorder %v435, %v443
        %vm454 = vcmp.eq.s32.totalorder %v436, %v443
        %vm455 = vcmp.eq.s32.totalorder %v437, %v443
        %vm456 = vcmp.eq.s32.totalorder %v438, %v443
        %vm457 = vcmp.eq.s32.totalorder %v439, %v443
        %vm458 = vcmp.eq.s32.totalorder %v440, %v443
        %vm459 = vcmp.eq.s32.totalorder %v441, %v443
        %v460 = vld [vmem:[%s172] sm:$0x1]
        %v462 = vlaneseq
        %v463 = vshrl.u32 %v462, 7
        %v464 = vsub.s32 0, %v463
        %v465 = vrot.slane %v460, %v464
        %466 = vset.pattern.permute.xlu0 0
        %467 = vperm.xlu0 %466, %v465
        %v468 = vpop.permute.xlu0 %467
        %v470 = vmul.f32 %v468, %v409
        %v471 = vmul.f32 %v468, %v410
        %v472 = vmul.f32 %v468, %v411
        %v473 = vmul.f32 %v468, %v412
        %v474 = vmul.f32 %v468, %v413
        %v475 = vmul.f32 %v468, %v414
        %v476 = vmul.f32 %v468, %v415
        %v477 = vmul.f32 %v468, %v416
        %v478 = vmul.f32 %v468, %v417
        %v479 = vmul.f32 %v468, %v418
        %v480 = vmul.f32 %v468, %v419
        %v481 = vmul.f32 %v468, %v420
        %v482 = vmul.f32 %v468, %v421
        %v483 = vmul.f32 %v468, %v422
        %v484 = vmul.f32 %v468, %v423
        %v485 = vmul.f32 %v468, %v424
        %v486 = vsel %vm444, %v409, %v470
        %v487 = vsel %vm445, %v410, %v471
        %v488 = vsel %vm446, %v411, %v472
        %v489 = vsel %vm447, %v412, %v473
        %v490 = vsel %vm448, %v413, %v474
        %v491 = vsel %vm449, %v414, %v475
        %v492 = vsel %vm450, %v415, %v476
        %v493 = vsel %vm451, %v416, %v477
        %v494 = vsel %vm452, %v417, %v478
        %v495 = vsel %vm453, %v418, %v479
        %v496 = vsel %vm454, %v419, %v480
        %v497 = vsel %vm455, %v420, %v481
        %v498 = vsel %vm456, %v421, %v482
        %v499 = vsel %vm457, %v422, %v483
        %v500 = vsel %vm458, %v423, %v484
        %v501 = vsel %vm459, %v424, %v485
        %502 = vst [vmem:[%s169] sm:$0xff] %v486
        %503 = vst [vmem:[%s169 + $0x8] sm:$0xff] %v487
        %504 = vst [vmem:[%s169 + $0x10] sm:$0xff] %v488
        %505 = vst [vmem:[%s169 + $0x18] sm:$0xff] %v489
        %506 = vst [vmem:[%s169 + $0x20] sm:$0xff] %v490
        %507 = vst [vmem:[%s169 + $0x28] sm:$0xff] %v491
        %508 = vst [vmem:[%s169 + $0x30] sm:$0xff] %v492
        %509 = vst [vmem:[%s169 + $0x38] sm:$0xff] %v493
        %510 = vst [vmem:[%s169 + $0x40] sm:$0xff] %v494
        %511 = vst [vmem:[%s169 + $0x48] sm:$0xff] %v495
        %512 = vst [vmem:[%s169 + $0x50] sm:$0xff] %v496
        %513 = vst [vmem:[%s169 + $0x58] sm:$0xff] %v497
        %514 = vst [vmem:[%s169 + $0x60] sm:$0xff] %v498
        %515 = vst [vmem:[%s169 + $0x68] sm:$0xff] %v499
        %516 = vst [vmem:[%s169 + $0x70] sm:$0xff] %v500
        %517 = vst [vmem:[%s169 + $0x78] sm:$0xff] %v501
        %s518 = sand.u32 %s79, 1
        %s519 = scalar_lea.sflag [#allocation4], %s518
        %s520 = sand.u32 %s79, 1
        %s521 = smul.addr %s520, 128
        %s522 = scalar_lea.vmem [#allocation5], %s521
        // Predicated region
        $region33: #{tpu_custom_call.1} parent=27 // pred_check
          %p523 = pneg %p89
        $region34: #{tpu_custom_call.1} parent=27 // pred_check_branch
          %525 = sbr.rel (%p523) target = $region36
        $region35: #{tpu_custom_call.1} parent=27 // pred_region
          %s527 = ssub.s32 2048, 2048
          %528 = vsyncadd %s519, %s527
          %s529 = smul.addr %s19, 16
          %s530 = smul.addr %s529, 128
          %s531 = scalar_lea.hbm %s2, %s530
          %s532 = sshll.u32 %s522, 4
          %s533 = int_to_ptr.vmem [resolvable:$true] %s532
          %538 = dma.vmem_to_hbm [thread:$0]  %s533, 2048, %s531, %s519, 128, 128, 8
        $region36: #{tpu_custom_call.1} parent=27 // pred_fallthru
          _
      $region28: #{tpu_custom_call.1} parent=5 // pred_fallthru
        _
      %p539 = scmp.le.s32.totalorder 2, %s14
      // Predicated region
      $region37: #{tpu_custom_call.1} parent=5 // pred_check
        %p540 = pneg %p539
      $region38: #{tpu_custom_call.1} parent=5 // pred_check_branch
        %542 = sbr.rel (%p540) target = $region40
      $region39: #{tpu_custom_call.1} parent=5 // pred_region
        %s543 = ssub.s32 %s14, 2
        // Predicated region
        $region41: #{tpu_custom_call.1} parent=39 // pred_check
          %p544 = pneg %p95
        $region42: #{tpu_custom_call.1} parent=39 // pred_check_branch
          %546 = sbr.rel (%p544) target = $region44
        $region43: #{tpu_custom_call.1} parent=39 // pred_region
          %s547 = sand.u32 %s80, 1
          %s548 = scalar_lea.sflag [#allocation4], %s547
          %s549 = sand.u32 %s80, 1
          %s550 = smul.addr %s549, 128
          %s551 = scalar_lea.vmem [#allocation5], %s550
          %552 = dma.done %s548, 2048
        $region44: #{tpu_custom_call.1} parent=39 // pred_fallthru
          _
      $region40: #{tpu_custom_call.1} parent=5 // pred_fallthru
        _
    $region6: #{tpu_custom_call.1} parent=1 // loop_footer
      %s18 = sadd.s32 1, %s14
    $region7: #{tpu_custom_call.1} parent=1 // loop_footer_branch
      %13 = sbr.rel target = $region3
    $region8: #{tpu_custom_call.1} parent=1 // loop_exit
      _
    %553 = vsyncpa [#allocation3], 1
    %s554 = scalar_lea.sflag [#allocation3], 1
    %555 = vsyncpa %s554, 1
    %556 = vsyncpa [#allocation4], 1
    %s557 = scalar_lea.sflag [#allocation4], 1
    %558 = vsyncpa %s557, 1

</llo_original>
